<compile_context>
chip_gen: v6e
topology: v6e:2x2x1
jax: 0.10.0
libtpu: 0.0.40
codegen_flags: <defaults>
</compile_context>

<pallas_src>
import numpy as np
import jax
import jax.numpy as jnp
from jax.experimental import pallas as pl
from jax.experimental.pallas import tpu as pltpu


def _round_up(x, m):
    return ((x + m - 1) // m) * m


def _tpu_vmem_capacity():
    try:
        return int(pltpu.get_tpu_info().vmem_capacity_bytes)
    except Exception:
        return 0  # unknown -> conservative defaults below


_VMEM_CAP = _tpu_vmem_capacity()
_BIG_VMEM = _VMEM_CAP >= 100 * 1024 * 1024                 # v5e/v6e (128 MiB phys)
_VMEM_LIMIT = (min(_VMEM_CAP // 2, 64 * 1024 * 1024)
               if _VMEM_CAP else 48 * 1024 * 1024)
_TM_CONV = 1024 if _BIG_VMEM else 512                      # rows/step, input conv
_TARGET_ROWS_FUSE = 2048 if _BIG_VMEM else 1024            # th * W budget, fuse
_MAX_LANE_TILE = 8192 if _BIG_VMEM else 4096               # lane tile, pool_h


def _choose_lane_tile(D, max_tile):
    """Lane tile for (*, D) blocks: D itself if small, else a 128-multiple
    divisor of D, else max_tile (caller pads D up to a multiple of it)."""
    if D <= max_tile:
        return D
    cap = max_tile - max_tile % 128
    for t in range(cap, 127, -128):
        if D % t == 0:
            return t
    return cap  # guarded: pool_h_all pads D; never a full-D mega block


def _choose_row_tile(H, W, target_rows, min_steps=1):
    """Rows of H per fuse step; must divide H and be 8-aligned (or equal H)."""
    cands = [t for t in range(1, H + 1) if H % t == 0 and (t % 8 == 0 or t == H)]
    ok = [t for t in cands if t * W <= target_rows and H // t >= min_steps]
    if ok:
        return max(ok)
    ok = [t for t in cands if H // t >= min_steps]
    return min(ok) if ok else min(cands)


# ---------------------------------------------------------------------------
# Kernel 1: fused BN(eval) + ReLU + 1x1 conv on flattened rows (bf16 in/out)
# ---------------------------------------------------------------------------

def _bn_relu_conv_kernel(x_ref, scale_ref, shift_ref, w_ref, o_ref):
    x = x_ref[...].astype(jnp.float32)                               # (TM, Cin)
    h = jnp.maximum(x * scale_ref[...] + shift_ref[...], 0.0)        # f32 BN+ReLU
    o_ref[...] = jnp.dot(h.astype(jnp.bfloat16), w_ref[...],
                         preferred_element_type=jnp.float32).astype(o_ref.dtype)


def bn_relu_conv1x1(x2d, scale, shift, w_bf16, *, tm):
    """relu(x*scale + shift) @ w.  x2d: (M, Cin) bf16, w: (Cin, Cout) bf16."""
    M, Cin = x2d.shape
    Cout = w_bf16.shape[1]
    TM = min(tm, _round_up(M, 8))
    if TM >= M and M >= 16:            # keep >=2 grid steps (feeds both v7x TCs)
        TM = _round_up((M + 1) // 2, 8)
    Mp = _round_up(M, TM)
    if Mp != M:
        x2d = jnp.pad(x2d, ((0, Mp - M), (0, 0)))   # padded rows sliced off below
    out = pl.pallas_call(
        _bn_relu_conv_kernel,
        out_shape=jax.ShapeDtypeStruct((Mp, Cout), jnp.bfloat16),
        grid=(Mp // TM,),
        in_specs=[
            pl.BlockSpec((TM, Cin), lambda i: (i, 0)),
            pl.BlockSpec((1, Cin), lambda i: (0, 0)),
            pl.BlockSpec((1, Cin), lambda i: (0, 0)),
            pl.BlockSpec((Cin, Cout), lambda i: (0, 0)),
        ],
        out_specs=pl.BlockSpec((TM, Cout), lambda i: (i, 0)),
        compiler_params=pltpu.CompilerParams(
            dimension_semantics=("parallel",), vmem_limit_bytes=_VMEM_LIMIT),
    )(x2d, scale.reshape(1, Cin), shift.reshape(1, Cin), w_bf16)
    return out[:M] if Mp != M else out


# ---------------------------------------------------------------------------
# Kernel 2: H-direction adaptive pooling for ALL levels in one pass
# ---------------------------------------------------------------------------

def _pool_h_kernel(p_ref, x_ref, o_ref):
    o_ref[0] = jnp.dot(p_ref[...], x_ref[0], preferred_element_type=jnp.float32)


def pool_h_all(x3d, p_bf16):
    """x3d: (N, H, D) bf16, p: (G_total, H) bf16 -> (N, G_total, D) f32."""
    N, H, D = x3d.shape
    G = p_bf16.shape[0]
    TD = _choose_lane_tile(D, _MAX_LANE_TILE)
    Dp = _round_up(D, TD)
    if Dp != D:
        x3d = jnp.pad(x3d, ((0, 0), (0, 0), (0, Dp - D)))
    out = pl.pallas_call(
        _pool_h_kernel,
        out_shape=jax.ShapeDtypeStruct((N, G, Dp), jnp.float32),
        grid=(N, Dp // TD),
        in_specs=[
            pl.BlockSpec((G, H), lambda n, d: (0, 0)),
            pl.BlockSpec((1, H, TD), lambda n, d: (n, 0, d)),
        ],
        out_specs=pl.BlockSpec((1, G, TD), lambda n, d: (n, 0, d)),
        compiler_params=pltpu.CompilerParams(
            dimension_semantics=("parallel", "parallel"),
            vmem_limit_bytes=_VMEM_LIMIT),
    )(p_bf16, x3d)
    return out[:, :, :D] if Dp != D else out


# ---------------------------------------------------------------------------
# Kernel 3: ALL pyramid levels in one kernel (grid=(N,)):
#   block-diag W-pool -> level BN/ReLU/1x1 conv -> commuted fuse-BN affine
#   -> block-diag W-upsample.  Output tmp_all (N, G_total, W*LVL) bf16.
# ---------------------------------------------------------------------------

def _make_levels_kernel(L, g_total, W, bt_size, level_size, r_off, n_rows):
    def kernel(*refs):
        hp_ref, pw_ref, uw_ref, lsc_ref, lsh_ref, fsc_ref, fsh_ref = refs[:7]
        w_refs = refs[7:7 + L]
        o_ref = refs[7 + L]
        x = hp_ref[0].reshape(g_total * W, bt_size).astype(jnp.bfloat16)
        pooled = jnp.dot(pw_ref[...], x, preferred_element_type=jnp.float32)
        h = jnp.maximum(pooled * lsc_ref[...] + lsh_ref[...], 0.0).astype(jnp.bfloat16)
        levs = [jnp.dot(h[r_off[l]:r_off[l] + n_rows[l]], w_refs[l][...],
                        preferred_element_type=jnp.float32) for l in range(L)]
        lev = jnp.concatenate(levs, axis=0)                       # (GW_total, LVL)
        lev = lev * fsc_ref[...] + fsh_ref[...]                   # commuted fuse BN
        up = jnp.dot(uw_ref[...], lev.astype(jnp.bfloat16),
                     preferred_element_type=jnp.float32)          # (G_total*W, LVL)
        o_ref[0] = up.astype(jnp.bfloat16).reshape(g_total, W * level_size)
    return kernel


def levels_fused(hp4, ops, level_w, lsc_rows, lsh_rows, fsc_rows, fsh_rows,
                 bt_size, level_size):
    N, g_total, W, _ = hp4.shape
    L = len(level_w)
    gw_total = int(ops["pw_blk"].shape[0])
    kernel = _make_levels_kernel(L, g_total, W, bt_size, level_size,
                                 ops["r_off"], ops["n_rows"])
    in_specs = [
        pl.BlockSpec((1, g_total, W, bt_size), lambda n: (n, 0, 0, 0)),
        pl.BlockSpec((gw_total, g_total * W), lambda n: (0, 0)),
        pl.BlockSpec((g_total * W, gw_total), lambda n: (0, 0)),
        pl.BlockSpec((gw_total, bt_size), lambda n: (0, 0)),
        pl.BlockSpec((gw_total, bt_size), lambda n: (0, 0)),
        pl.BlockSpec((gw_total, level_size), lambda n: (0, 0)),
        pl.BlockSpec((gw_total, level_size), lambda n: (0, 0)),
    ]
    for _ in range(L):
        in_specs.append(pl.BlockSpec((bt_size, level_size), lambda n: (0, 0)))
    return pl.pallas_call(
        kernel,
        out_shape=jax.ShapeDtypeStruct((N, g_total, W * level_size), jnp.bfloat16),
        grid=(N,),
        in_specs=in_specs,
        out_specs=pl.BlockSpec((1, g_total, W * level_size), lambda n: (n, 0, 0)),
        compiler_params=pltpu.CompilerParams(
            dimension_semantics=("parallel",), vmem_limit_bytes=_VMEM_LIMIT),
    )(hp4, ops["pw_blk"], ops["uw_blk"], lsc_rows, lsh_rows, fsc_rows, fsh_rows,
      *level_w)


# ---------------------------------------------------------------------------
# Kernel 4: final fuse.  Per (n, h-tile): H-upsample each level via one MXU
# matmul, ReLU, and accumulate group-wise matmuls (bt group + each level) so
# neither the channel concat nor the full-res level maps ever touch HBM.
# ---------------------------------------------------------------------------

def _make_fuse_kernel(L, th, W, gh_list, h_off, bt_size, level_size, out_size):
    rows = th * W

    def kernel(*refs):
        bt_ref, tmp_ref = refs[0], refs[1]
        uh_refs = refs[2:2 + L]
        sc0_ref, sh0_ref = refs[2 + L], refs[3 + L]
        w_refs = refs[4 + L:5 + 2 * L]
        o_ref = refs[5 + 2 * L]
        # group 0: the bottleneck features themselves
        xb = bt_ref[0].reshape(rows, bt_size).astype(jnp.float32)
        h0 = jnp.maximum(xb * sc0_ref[...] + sh0_ref[...], 0.0)
        acc = jnp.dot(h0.astype(jnp.bfloat16), w_refs[0][...],
                      preferred_element_type=jnp.float32)
        # groups 1..L: H-upsample on the MXU (single dot), ReLU, matmul-accumulate
        for l in range(L):
            gh = gh_list[l]
            tmp_l = tmp_ref[0, h_off[l]:h_off[l] + gh]             # (gh, W*LVL) bf16
            up = jnp.dot(uh_refs[l][...], tmp_l,
                         preferred_element_type=jnp.float32)       # (th, W*LVL)
            hl = jnp.maximum(up, 0.0).astype(jnp.bfloat16).reshape(rows, level_size)
            acc = acc + jnp.dot(hl, w_refs[1 + l][...],
                                preferred_element_type=jnp.float32)
        o_ref[0] = acc.reshape(th, W, out_size).astype(o_ref.dtype)
    return kernel


def fuse_all(bt4, tmp_all, ops, sc0, sh0, w_groups, bt_size, level_size,
             out_size, th):
    N, H, W, _ = bt4.shape
    gh_list, h_off = ops["gh"], ops["h_off"]
    L = len(gh_list)
    g_total = ops["g_total"]
    kernel = _make_fuse_kernel(L, th, W, gh_list, h_off, bt_size, level_size,
                               out_size)
    in_specs = [
        pl.BlockSpec((1, th, W, bt_size), lambda n, h: (n, h, 0, 0)),
        pl.BlockSpec((1, g_total, W * level_size), lambda n, h: (n, 0, 0)),
    ]
    for l in range(L):
        in_specs.append(pl.BlockSpec((th, gh_list[l]), lambda n, h: (h, 0)))
    in_specs.append(pl.BlockSpec((1, bt_size), lambda n, h: (0, 0)))
    in_specs.append(pl.BlockSpec((1, bt_size), lambda n, h: (0, 0)))
    in_specs.append(pl.BlockSpec((bt_size, out_size), lambda n, h: (0, 0)))
    for _ in range(L):
        in_specs.append(pl.BlockSpec((level_size, out_size), lambda n, h: (0, 0)))

    args = [bt4, tmp_all] + list(ops["uh"]) + [sc0, sh0] + list(w_groups)
    return pl.pallas_call(
        kernel,
        out_shape=jax.ShapeDtypeStruct((N, H, W, out_size), jnp.float32),
        grid=(N, H // th),
        in_specs=in_specs,
        out_specs=pl.BlockSpec((1, th, W, out_size), lambda n, h: (n, h, 0, 0)),
        compiler_params=pltpu.CompilerParams(
            dimension_semantics=("parallel", "parallel"),
            vmem_limit_bytes=_VMEM_LIMIT),
    )(*args)


# ---------------------------------------------------------------------------
# Spatial operator construction (numpy, cached per (H, W, N))
# ---------------------------------------------------------------------------

def adaptive_pool_matrix_1d(in_size, out_size):
    """Row-stochastic matrix implementing torch adaptive_avg_pool1d bins."""
    P = np.zeros((out_size, in_size), np.float32)
    for i in range(out_size):
        s = (i * in_size) // out_size
        e = -((-(i + 1) * in_size) // out_size)      # ceil((i+1)*in/out)
        P[i, s:e] = 1.0 / (e - s)
    assert np.allclose(P.sum(1), 1.0, atol=1e-5)
    return P


def bilinear_matrix_1d(out_size, in_size):
    """Matches F.interpolate(mode='bilinear', align_corners=False) per axis."""
    U = np.zeros((out_size, in_size), np.float32)
    if in_size == 1:
        U[:, 0] = 1.0
        return U
    scale = in_size / out_size
    for i in range(out_size):
        src = max((i + 0.5) * scale - 0.5, 0.0)
        i0 = min(int(np.floor(src)), in_size - 1)
        i1 = min(i0 + 1, in_size - 1)
        lam = src - i0
        U[i, i0] += 1.0 - lam
        U[i, i1] += lam
    assert np.allclose(U.sum(1), 1.0, atol=1e-5)   # required for the BN commute
    return U


# ---------------------------------------------------------------------------
# Parameters (deterministic synthetic init; eval-mode BN folded)
# ---------------------------------------------------------------------------

def make_bn_relu_conv_params(key, cin, cout, eps=1e-5):
    k1, k2, k3, k4, k5 = jax.random.split(key, 5)
    gamma = 1.0 + 0.1 * jax.random.normal(k1, (cin,), jnp.float32)
    beta = 0.1 * jax.random.normal(k2, (cin,), jnp.float32)
    mean = 0.1 * jax.random.normal(k3, (cin,), jnp.float32)
    var = 1.0 + 0.1 * jax.random.uniform(k4, (cin,), jnp.float32)
    w = jax.random.normal(k5, (cin, cout), jnp.float32) / np.sqrt(cin)
    scale = gamma / jnp.sqrt(var + eps)
    shift = beta - mean * scale
    return scale, shift, w.astype(jnp.bfloat16)     # weights stored bf16 for MXU


class SpatialPyramidPoolingPallas:
    """Pallas implementation of SwiftNet SpatialPyramidPooling
    (square_grid=False, fixed_size=None, use_bn=True, drop_rate=0, all k=1)."""

    def __init__(self, key, num_maps_in, num_levels, bt_size=512, level_size=128,
                 out_size=128, grids=(6, 3, 2, 1)):
        self.num_levels = num_levels
        self.bt_size = bt_size
        self.level_size = level_size
        self.out_size = out_size
        self.grids = grids
        keys = jax.random.split(key, num_levels + 2)
        self.spp_bn = make_bn_relu_conv_params(keys[0], num_maps_in, bt_size)
        self.level_params = [
            make_bn_relu_conv_params(keys[1 + i], bt_size, level_size)
            for i in range(num_levels)
        ]
        final_size = bt_size + num_levels * level_size
        self.spp_fuse = make_bn_relu_conv_params(keys[-1], final_size, out_size)
        self._cache = {}

    def _get_ops(self, H, W, N):
        key = (H, W, N)
        if key in self._cache:
            return self._cache[key]
        L = self.num_levels
        BT, LVL = self.bt_size, self.level_size
        ar = W / H
        gh_list = [self.grids[i] for i in range(L)]
        gw_list = [max(1, round(ar * self.grids[i])) for i in range(L)]  # ref rounding
        h_off = [int(o) for o in np.cumsum([0] + gh_list[:-1])]
        g_total = int(sum(gh_list))
        n_rows = [gh_list[l] * gw_list[l] for l in range(L)]
        r_off = [int(o) for o in np.cumsum([0] + n_rows[:-1])]
        gw_total = int(sum(n_rows))

        ph_all = np.concatenate([adaptive_pool_matrix_1d(H, g) for g in gh_list], 0)
        pw_blk = np.zeros((gw_total, g_total * W), np.float32)
        uw_blk = np.zeros((g_total * W, gw_total), np.float32)
        for l in range(L):
            pw = adaptive_pool_matrix_1d(W, gw_list[l])
            uw = bilinear_matrix_1d(W, gw_list[l])
            for g in range(gh_list[l]):
                r0 = r_off[l] + g * gw_list[l]
                c0 = (h_off[l] + g) * W
                pw_blk[r0:r0 + gw_list[l], c0:c0 + W] = pw
                uw_blk[c0:c0 + W, r0:r0 + gw_list[l]] = uw
        uh = [jnp.asarray(bilinear_matrix_1d(H, g), jnp.bfloat16) for g in gh_list]

        # per-row level-BN params, and the fuse-BN affine commuted into the levels
        lsc = jnp.concatenate([jnp.broadcast_to(self.level_params[l][0][None, :],
                                                (n_rows[l], BT)) for l in range(L)], 0)
        lsh = jnp.concatenate([jnp.broadcast_to(self.level_params[l][1][None, :],
                                                (n_rows[l], BT)) for l in range(L)], 0)
        fsc_full, fsh_full, fw_full = self.spp_fuse
        fsc = jnp.concatenate(
            [jnp.broadcast_to(fsc_full[BT + l * LVL: BT + (l + 1) * LVL][None, :],
                              (n_rows[l], LVL)) for l in range(L)], 0)
        fsh = jnp.concatenate(
            [jnp.broadcast_to(fsh_full[BT + l * LVL: BT + (l + 1) * LVL][None, :],
                              (n_rows[l], LVL)) for l in range(L)], 0)
        level_w = [self.level_params[l][2] for l in range(L)]
        w_groups = [fw_full[:BT]] + [fw_full[BT + l * LVL: BT + (l + 1) * LVL]
                                     for l in range(L)]
        sc0 = fsc_full[:BT].reshape(1, BT)
        sh0 = fsh_full[:BT].reshape(1, BT)

        th = _choose_row_tile(H, W, _TARGET_ROWS_FUSE,
                              min_steps=2 if N == 1 else 1)

        ops = dict(
            g_total=g_total, gw_total=gw_total, gh=gh_list, gw=gw_list,
            h_off=h_off, r_off=r_off, n_rows=n_rows, th=th,
            ph_all=jnp.asarray(ph_all, jnp.bfloat16),
            pw_blk=jnp.asarray(pw_blk, jnp.bfloat16),
            uw_blk=jnp.asarray(uw_blk, jnp.bfloat16),
            uh=uh, lsc=lsc, lsh=lsh, fsc=fsc, fsh=fsh,
            level_w=level_w, w_groups=w_groups, sc0=sc0, sh0=sh0,
        )
        self._cache[key] = ops
        return ops

    def __call__(self, x):
        # x: NCHW float32
        N, C, H, W = x.shape
        ops = self._get_ops(H, W, N)

        xr = jnp.transpose(x.astype(jnp.bfloat16), (0, 2, 3, 1)).reshape(N * H * W, C)
        bt = bn_relu_conv1x1(xr, *self.spp_bn, tm=_TM_CONV)      # (N*H*W, BT) bf16
        bt4 = bt.reshape(N, H, W, self.bt_size)

        # one pass of H-pooling for all pyramid levels (stacked 1-D operators)
        hp = pool_h_all(bt4.reshape(N, H, W * self.bt_size), ops["ph_all"])
        hp4 = hp.reshape(N, ops["g_total"], W, self.bt_size)

        # all levels in ONE kernel: W-pool + BN/ReLU/1x1 conv + commuted fuse-BN
        # affine + W-upsample
        tmp_all = levels_fused(hp4, ops, ops["level_w"], ops["lsc"], ops["lsh"],
                               ops["fsc"], ops["fsh"], self.bt_size,
                               self.level_size)

        # final fuse: per-tile MXU H-upsample + grouped ReLU/matmul accumulation
        out4 = fuse_all(bt4, tmp_all, ops, ops["sc0"], ops["sh0"],
                        ops["w_groups"], self.bt_size, self.level_size,
                        self.out_size, ops["th"])
        return jnp.transpose(out4, (0, 3, 1, 2))               # back to NCHW


if __name__ == "__main__":
    key = jax.random.PRNGKey(0)
    kx, kp = jax.random.split(key)
    N, C, H, W = 2, 4, 16, 16
    x = jax.random.normal(kx, (N, C, H, W), jnp.float32)

    spp = SpatialPyramidPoolingPallas(
        kp, num_maps_in=C, num_levels=3,
        bt_size=32, level_size=16, out_size=16, grids=(6, 3, 2))

    y = spp(x)
    y = jax.block_until_ready(y)
    assert y.shape == (N, 16, H, W), y.shape
    assert bool(jnp.all(jnp.isfinite(y)))
    print("KERNEL_OK")
</pallas_src>

<mosaic_0001>
module attributes {stable_mosaic.version = 11 : i64} {
  func.func @_bn_relu_conv_kernel(%arg0: i32, %arg1: memref<256x4xbf16, #tpu.memory_space<vmem>>, %arg2: memref<1x4xf32, #tpu.memory_space<vmem>>, %arg3: memref<1x4xf32, #tpu.memory_space<vmem>>, %arg4: memref<4x32xbf16, #tpu.memory_space<vmem>>, %arg5: memref<256x32xbf16, #tpu.memory_space<vmem>>) attributes {dimension_semantics = [#tpu.dimension_semantics<parallel>], iteration_bounds = array<i64: 2>, scalar_prefetch = 0 : i64, scratch_operands = 0 : i64, tpu.core_type = #tpu.core_type<tc>, window_params = [{transform_indices = @transform_0, window_bounds = array<i64: 256, 4>}, {pipeline_mode = #tpu.pipeline_mode<synchronous>, transform_indices = @transform_1, window_bounds = array<i64: 1, 4>}, {pipeline_mode = #tpu.pipeline_mode<synchronous>, transform_indices = @transform_2, window_bounds = array<i64: 1, 4>}, {pipeline_mode = #tpu.pipeline_mode<synchronous>, transform_indices = @transform_3, window_bounds = array<i64: 4, 32>}, {transform_indices = @transform_4, window_bounds = array<i64: 256, 32>}]} {
    %c0 = arith.constant 0 : index
    %c0_0 = arith.constant 0 : index
    %0 = vector.load %arg1[%c0, %c0_0] : memref<256x4xbf16, #tpu.memory_space<vmem>>, vector<256x4xbf16>
    %1 = arith.extf %0 : vector<256x4xbf16> to vector<256x4xf32>
    %c0_1 = arith.constant 0 : index
    %c0_2 = arith.constant 0 : index
    %2 = vector.load %arg2[%c0_1, %c0_2] : memref<1x4xf32, #tpu.memory_space<vmem>>, vector<1x4xf32>
    %3 = vector.broadcast %2 : vector<1x4xf32> to vector<256x4xf32>
    %4 = arith.mulf %1, %3 : vector<256x4xf32>
    %c0_3 = arith.constant 0 : index
    %c0_4 = arith.constant 0 : index
    %5 = vector.load %arg3[%c0_3, %c0_4] : memref<1x4xf32, #tpu.memory_space<vmem>>, vector<1x4xf32>
    %6 = vector.broadcast %5 : vector<1x4xf32> to vector<256x4xf32>
    %7 = arith.addf %4, %6 : vector<256x4xf32>
    %cst = arith.constant 0.000000e+00 : f32
    %8 = vector.broadcast %cst : f32 to vector<256x4xf32>
    %9 = arith.maximumf %7, %8 : vector<256x4xf32>
    %10 = arith.truncf %9 : vector<256x4xf32> to vector<256x4xbf16>
    %c0_5 = arith.constant 0 : index
    %c0_6 = arith.constant 0 : index
    %11 = vector.load %arg4[%c0_5, %c0_6] : memref<4x32xbf16, #tpu.memory_space<vmem>>, vector<4x32xbf16>
    %cst_7 = arith.constant dense<0.000000e+00> : vector<256x32xf32>
    %12 = tpu.matmul %10, %11, %cst_7 {dimension_numbers = #tpu.dot_dimension_numbers<[1], [0], [0], [1], [0, 0, 1, 1], [], []>} : vector<256x4xbf16>, vector<4x32xbf16>, vector<256x32xf32> -> vector<256x32xf32>
    %13 = arith.truncf %12 : vector<256x32xf32> to vector<256x32xbf16>
    %c0_8 = arith.constant 0 : index
    %c0_9 = arith.constant 0 : index
    %14 = vector.load %arg5[%c0_8, %c0_9] : memref<256x32xbf16, #tpu.memory_space<vmem>>, vector<256x32xbf16>
    tpu.vector_store %arg5[%c0_8, %c0_9], %13 {strides = array<i32>} : memref<256x32xbf16, #tpu.memory_space<vmem>>, vector<256x32xbf16>,
    return
  }
  func.func @transform_0(%arg0: i32) -> (i32, i32) {
    %c0_i32 = arith.constant 0 : i32
    %c0_i32_0 = arith.constant 0 : i32
    return %arg0, %c0_i32 : i32, i32
  }
  func.func @transform_1(%arg0: i32) -> (i32, i32) {
    %c0_i32 = arith.constant 0 : i32
    %c0_i32_0 = arith.constant 0 : i32
    %c0_i32_1 = arith.constant 0 : i32
    return %c0_i32, %c0_i32_0 : i32, i32
  }
  func.func @transform_2(%arg0: i32) -> (i32, i32) {
    %c0_i32 = arith.constant 0 : i32
    %c0_i32_0 = arith.constant 0 : i32
    %c0_i32_1 = arith.constant 0 : i32
    return %c0_i32, %c0_i32_0 : i32, i32
  }
  func.func @transform_3(%arg0: i32) -> (i32, i32) {
    %c0_i32 = arith.constant 0 : i32
    %c0_i32_0 = arith.constant 0 : i32
    %c0_i32_1 = arith.constant 0 : i32
    return %c0_i32, %c0_i32_0 : i32, i32
  }
  func.func @transform_4(%arg0: i32) -> (i32, i32) {
    %c0_i32 = arith.constant 0 : i32
    %c0_i32_0 = arith.constant 0 : i32
    return %arg0, %c0_i32 : i32, i32
  }
}

</mosaic_0001>

<llo_original>
// kernel: tpu_custom_call.1
$region0: #{tpu_custom_call.1}
  #allocation0 [shape = 'u32[]', space=smem, size = 0x4, offset = 0x4, fixed_abs, tag = 'smem constant byte address 0x4 - core index']
  #allocation1 [shape = 'u32[144,128]{1,0:T(1,128)}', space=vmem, size = 0x12000, scoped, tag = 'internal scratch']
  %s0 = inlined_call_operand.vmem [shape: bf16[512,4], index: 0, kind: input, shape index: {}]
  %s1 = inlined_call_operand.vmem [shape: f32[1,4], index: 1, kind: input, shape index: {}]
  %s2 = inlined_call_operand.vmem [shape: f32[1,4], index: 2, kind: input, shape index: {}]
  %s3 = inlined_call_operand.vmem [shape: bf16[4,32], index: 3, kind: input, shape index: {}]
  %s4 = inlined_call_operand.vmem [shape: bf16[512,32], index: 4, kind: output, shape index: {}]
  %s5 = sld [smem:[#allocation0]]
  $region49: #{tpu_custom_call.1} parent=0
    _
  %s7 = ssub.s32 1, %s5
  %s8 = scalar_select 0, %s7, %s5
  loop: start=0, step=1, limit=4
  $region2: #{tpu_custom_call.1} parent=0 // loop_pre_header
    _
  $region3: #{tpu_custom_call.1} parent=0 // loop_header
    %s10 = sphi 0, %s14
    %p11 = scmp.ge.s32.totalorder %s10, 4
    %s20 = sphi 0, %s22
    %s23 = sphi 0, %s20
    %s24 = sphi 0, %s23
    %s40 = sphi 0, %s24
    %s44 = sphi 0, %s44
    %s46 = sphi 0, %s44
    %s47 = sphi 0, %s46
    %s61 = sphi 0, %s47
    %s65 = sphi 0, %s65
    %s67 = sphi 0, %s65
    %s68 = sphi 0, %s67
    %s82 = sphi 0, %s68
    %s86 = sphi 0, %s86
    %s88 = sphi 0, %s86
    %s89 = sphi 0, %s88
    %s103 = sphi 0, %s89
    %s109 = sphi 0, %s111
    %s112 = sphi 0, %s109
    %s113 = sphi 0, %s112
    %s129 = sphi 0, %s113
  $region4: #{tpu_custom_call.1} parent=0 // loop_header_branch
    %13 = sbr.rel (%p11) target = $region8
  $region5: #{tpu_custom_call.1} parent=0 // loop_body
    %s15 = ssub.s32 %s10, 1
    %s16 = ssub.s32 %s10, 2
    %s17 = sadd.s32 %s10, 1
    %s18 = ssub.s32 %s10, %s17
    %p19 = scmp.eq.s32.totalorder %s18, 0
    %s21 = sadd.s32 %s20, 1
    %s22 = scalar_select %p19, %s20, %s21
    %p25 = pneg %p19
    %p26 = scmp.eq.s32.totalorder %s10, 1
    %p27 = por %p25, %p26
    %p28 = scmp.ne.s32.totalorder %s20, %s23
    %p29 = scmp.eq.s32.totalorder %s10, 0
    %p30 = por %p28, %p29
    %p31 = scmp.ne.s32.totalorder %s20, %s23
    %p32 = scmp.eq.s32.totalorder %s15, 1
    %p33 = por %p31, %p32
    %p34 = scmp.ne.s32.totalorder %s23, %s24
    %p35 = scmp.eq.s32.totalorder %s15, 0
    %p36 = por %p34, %p35
    %p37 = scmp.ne.s32.totalorder %s23, %s24
    %p38 = scmp.eq.s32.totalorder %s16, 1
    %p39 = por %p37, %p38
    %p41 = scmp.ne.s32.totalorder %s24, %s40
    %p42 = scmp.eq.s32.totalorder %s16, 0
    %p43 = por %p41, %p42
    %s45 = sadd.s32 %s44, 1
    %p48 = scmp.eq.s32.totalorder %s10, 1
    %p49 = scmp.ne.s32.totalorder %s44, %s46
    %p50 = scmp.eq.s32.totalorder %s10, 0
    %p51 = por %p49, %p50
    %p52 = scmp.ne.s32.totalorder %s44, %s46
    %p53 = scmp.eq.s32.totalorder %s15, 1
    %p54 = por %p52, %p53
    %p55 = scmp.ne.s32.totalorder %s46, %s47
    %p56 = scmp.eq.s32.totalorder %s15, 0
    %p57 = por %p55, %p56
    %p58 = scmp.ne.s32.totalorder %s46, %s47
    %p59 = scmp.eq.s32.totalorder %s16, 1
    %p60 = por %p58, %p59
    %p62 = scmp.ne.s32.totalorder %s47, %s61
    %p63 = scmp.eq.s32.totalorder %s16, 0
    %p64 = por %p62, %p63
    %s66 = sadd.s32 %s65, 1
    %p69 = scmp.eq.s32.totalorder %s10, 1
    %p70 = scmp.ne.s32.totalorder %s65, %s67
    %p71 = scmp.eq.s32.totalorder %s10, 0
    %p72 = por %p70, %p71
    %p73 = scmp.ne.s32.totalorder %s65, %s67
    %p74 = scmp.eq.s32.totalorder %s15, 1
    %p75 = por %p73, %p74
    %p76 = scmp.ne.s32.totalorder %s67, %s68
    %p77 = scmp.eq.s32.totalorder %s15, 0
    %p78 = por %p76, %p77
    %p79 = scmp.ne.s32.totalorder %s67, %s68
    %p80 = scmp.eq.s32.totalorder %s16, 1
    %p81 = por %p79, %p80
    %p83 = scmp.ne.s32.totalorder %s68, %s82
    %p84 = scmp.eq.s32.totalorder %s16, 0
    %p85 = por %p83, %p84
    %s87 = sadd.s32 %s86, 1
    %p90 = scmp.eq.s32.totalorder %s10, 1
    %p91 = scmp.ne.s32.totalorder %s86, %s88
    %p92 = scmp.eq.s32.totalorder %s10, 0
    %p93 = por %p91, %p92
    %p94 = scmp.ne.s32.totalorder %s86, %s88
    %p95 = scmp.eq.s32.totalorder %s15, 1
    %p96 = por %p94, %p95
    %p97 = scmp.ne.s32.totalorder %s88, %s89
    %p98 = scmp.eq.s32.totalorder %s15, 0
    %p99 = por %p97, %p98
    %p100 = scmp.ne.s32.totalorder %s88, %s89
    %p101 = scmp.eq.s32.totalorder %s16, 1
    %p102 = por %p100, %p101
    %p104 = scmp.ne.s32.totalorder %s89, %s103
    %p105 = scmp.eq.s32.totalorder %s16, 0
    %p106 = por %p104, %p105
    %s107 = ssub.s32 %s10, %s17
    %p108 = scmp.eq.s32.totalorder %s107, 0
    %s110 = sadd.s32 %s109, 1
    %s111 = scalar_select %p108, %s109, %s110
    %p114 = pneg %p108
    %p115 = scmp.eq.s32.totalorder %s10, 1
    %p116 = por %p114, %p115
    %p117 = scmp.ne.s32.totalorder %s109, %s112
    %p118 = scmp.eq.s32.totalorder %s10, 0
    %p119 = por %p117, %p118
    %p120 = scmp.ne.s32.totalorder %s109, %s112
    %p121 = scmp.eq.s32.totalorder %s15, 1
    %p122 = por %p120, %p121
    %p123 = scmp.ne.s32.totalorder %s112, %s113
    %p124 = scmp.eq.s32.totalorder %s15, 0
    %p125 = por %p123, %p124
    %p126 = scmp.ne.s32.totalorder %s112, %s113
    %p127 = scmp.eq.s32.totalorder %s16, 1
    %p128 = por %p126, %p127
    %p130 = scmp.ne.s32.totalorder %s113, %s129
    %p131 = scmp.eq.s32.totalorder %s16, 0
    %p132 = por %p130, %p131
    %p133 = scmp.le.s32.totalorder 1, %s10
    %p134 = scmp.lt.s32.totalorder %s10, 3
    %p135 = pnand %p133, %p134
    %p136 = pneg %p135
    // Predicated region
    $region9: #{tpu_custom_call.1} parent=5 // pred_check
      _
    $region10: #{tpu_custom_call.1} parent=5 // pred_check_branch
      %138 = sbr.rel (%p135) target = $region12
    $region11: #{tpu_custom_call.1} parent=5 // pred_region
      %s139 = ssub.s32 %s10, 1
      // Predicated region
      $region13: #{tpu_custom_call.1} parent=11 // pred_check
        %p140 = pneg %p57
      $region14: #{tpu_custom_call.1} parent=11 // pred_check_branch
        %142 = sbr.rel (%p140) target = $region16
      $region15: #{tpu_custom_call.1} parent=11 // pred_region
        _
      $region16: #{tpu_custom_call.1} parent=11 // pred_fallthru
        _
      // Predicated region
      $region17: #{tpu_custom_call.1} parent=11 // pred_check
        %p143 = pneg %p78
      $region18: #{tpu_custom_call.1} parent=11 // pred_check_branch
        %145 = sbr.rel (%p143) target = $region20
      $region19: #{tpu_custom_call.1} parent=11 // pred_region
        _
      $region20: #{tpu_custom_call.1} parent=11 // pred_fallthru
        _
      // Predicated region
      $region21: #{tpu_custom_call.1} parent=11 // pred_check
        %p146 = pneg %p99
      $region22: #{tpu_custom_call.1} parent=11 // pred_check_branch
        %148 = sbr.rel (%p146) target = $region24
      $region23: #{tpu_custom_call.1} parent=11 // pred_region
        _
      $region24: #{tpu_custom_call.1} parent=11 // pred_fallthru
        _
    $region12: #{tpu_custom_call.1} parent=5 // pred_fallthru
      _
    %p149 = scmp.lt.s32.totalorder %s10, 2
    // Predicated region
    $region25: #{tpu_custom_call.1} parent=5 // pred_check
      %p150 = pneg %p149
    $region26: #{tpu_custom_call.1} parent=5 // pred_check_branch
      %152 = sbr.rel (%p150) target = $region28
    $region27: #{tpu_custom_call.1} parent=5 // pred_region
      // Predicated region
      $region29: #{tpu_custom_call.1} parent=27 // pred_check
        %p153 = pneg %p30
      $region30: #{tpu_custom_call.1} parent=27 // pred_check_branch
        %155 = sbr.rel (%p153) target = $region32
      $region31: #{tpu_custom_call.1} parent=27 // pred_region
        %s156 = smul.u32 32, %s10
        %p157 = scmp.lt.s32.totalorder %s156, 63
        %s158 = scalar_select %p157, %s156, 63
        %s159 = smul.addr %s158, 4
        %s160 = scalar_lea.vmem %s0, %s159
        %s161 = smul.u32 32, %s10
      $region32: #{tpu_custom_call.1} parent=27 // pred_fallthru
        _
    $region28: #{tpu_custom_call.1} parent=5 // pred_fallthru
      _
    %p162 = scmp.le.s32.totalorder 1, %s10
    %p163 = scmp.lt.s32.totalorder %s10, 3
    %p164 = pnand %p162, %p163
    %p165 = pneg %p164
    // Predicated region
    $region33: #{tpu_custom_call.1} parent=5 // pred_check
      _
    $region34: #{tpu_custom_call.1} parent=5 // pred_check_branch
      %167 = sbr.rel (%p164) target = $region36
    $region35: #{tpu_custom_call.1} parent=5 // pred_region
      %s168 = ssub.s32 %s10, 1
      %s169 = smul.u32 32, %s15
      %p170 = scmp.lt.s32.totalorder %s169, 63
      %s171 = scalar_select %p170, %s169, 63
      %s172 = smul.addr %s171, 4
      %s173 = scalar_lea.vmem %s0, %s172
      %p174 = pneg %p36
      %p175 = pneg %p33
      %p176 = pneg %p57
      %p177 = pneg %p54
      %p178 = pneg %p78
      %p179 = pneg %p75
      %p180 = pneg %p99
      %p181 = pneg %p96
      %p182 = pneg %p125
      %p183 = pneg %p122
      %s184 = smul.u32 32, %s15
      %p185 = scmp.lt.s32.totalorder %s184, 63
      %s186 = scalar_select %p185, %s184, 63
      %s187 = smul.addr %s186, 4
      %s188 = scalar_lea.vmem %s4, %s187
      %s189 = smul.u32 32, %s15
      %p190 = scmp.lt.s32.totalorder %s189, 63
      %s191 = scalar_select %p190, %s189, 63
      %s192 = smul.addr %s191, 4
      %s193 = scalar_lea.vmem %s0, %s192
      %s194 = smul.u32 32, %s15
      %s195 = smul.u32 32, %s15
      %p196 = scmp.lt.s32.totalorder %s195, 63
      %s197 = scalar_select %p196, %s195, 63
      %s198 = smul.addr %s197, 4
      %s199 = scalar_lea.vmem %s4, %s198
      %s200 = smul.u32 32, %s15
      %v202 = vld [vmem:[%s193] sm:$0xf]
      %v203 = vld [vmem:[%s193 + $0x4] sm:$0xf]
      %v204 = vld [vmem:[%s193 + $0x8] sm:$0xf]
      %v205 = vld [vmem:[%s193 + $0xc] sm:$0xf]
      %v206 = vld [vmem:[%s193 + $0x10] sm:$0xf]
      %v207 = vld [vmem:[%s193 + $0x14] sm:$0xf]
      %v208 = vld [vmem:[%s193 + $0x18] sm:$0xf]
      %v209 = vld [vmem:[%s193 + $0x1c] sm:$0xf]
      %v210 = vld [vmem:[%s193 + $0x20] sm:$0xf]
      %v211 = vld [vmem:[%s193 + $0x24] sm:$0xf]
      %v212 = vld [vmem:[%s193 + $0x28] sm:$0xf]
      %v213 = vld [vmem:[%s193 + $0x2c] sm:$0xf]
      %v214 = vld [vmem:[%s193 + $0x30] sm:$0xf]
      %v215 = vld [vmem:[%s193 + $0x34] sm:$0xf]
      %v216 = vld [vmem:[%s193 + $0x38] sm:$0xf]
      %v217 = vld [vmem:[%s193 + $0x3c] sm:$0xf]
      %v218 = vld [vmem:[%s193 + $0x40] sm:$0xf]
      %v219 = vld [vmem:[%s193 + $0x44] sm:$0xf]
      %v220 = vld [vmem:[%s193 + $0x48] sm:$0xf]
      %v221 = vld [vmem:[%s193 + $0x4c] sm:$0xf]
      %v222 = vld [vmem:[%s193 + $0x50] sm:$0xf]
      %v223 = vld [vmem:[%s193 + $0x54] sm:$0xf]
      %v224 = vld [vmem:[%s193 + $0x58] sm:$0xf]
      %v225 = vld [vmem:[%s193 + $0x5c] sm:$0xf]
      %v226 = vld [vmem:[%s193 + $0x60] sm:$0xf]
      %v227 = vld [vmem:[%s193 + $0x64] sm:$0xf]
      %v228 = vld [vmem:[%s193 + $0x68] sm:$0xf]
      %v229 = vld [vmem:[%s193 + $0x6c] sm:$0xf]
      %v230 = vld [vmem:[%s193 + $0x70] sm:$0xf]
      %v231 = vld [vmem:[%s193 + $0x74] sm:$0xf]
      %v232 = vld [vmem:[%s193 + $0x78] sm:$0xf]
      %v233 = vld [vmem:[%s193 + $0x7c] sm:$0xf]
      %v234 = vunpack.c.l.bf16 %v202
      %v235 = vunpack.c.l.bf16 %v203
      %v236 = vunpack.c.l.bf16 %v204
      %v237 = vunpack.c.l.bf16 %v205
      %v238 = vunpack.c.l.bf16 %v206
      %v239 = vunpack.c.l.bf16 %v207
      %v240 = vunpack.c.l.bf16 %v208
      %v241 = vunpack.c.l.bf16 %v209
      %v242 = vunpack.c.l.bf16 %v210
      %v243 = vunpack.c.l.bf16 %v211
      %v244 = vunpack.c.l.bf16 %v212
      %v245 = vunpack.c.l.bf16 %v213
      %v246 = vunpack.c.l.bf16 %v214
      %v247 = vunpack.c.l.bf16 %v215
      %v248 = vunpack.c.l.bf16 %v216
      %v249 = vunpack.c.l.bf16 %v217
      %v250 = vunpack.c.l.bf16 %v218
      %v251 = vunpack.c.l.bf16 %v219
      %v252 = vunpack.c.l.bf16 %v220
      %v253 = vunpack.c.l.bf16 %v221
      %v254 = vunpack.c.l.bf16 %v222
      %v255 = vunpack.c.l.bf16 %v223
      %v256 = vunpack.c.l.bf16 %v224
      %v257 = vunpack.c.l.bf16 %v225
      %v258 = vunpack.c.l.bf16 %v226
      %v259 = vunpack.c.l.bf16 %v227
      %v260 = vunpack.c.l.bf16 %v228
      %v261 = vunpack.c.l.bf16 %v229
      %v262 = vunpack.c.l.bf16 %v230
      %v263 = vunpack.c.l.bf16 %v231
      %v264 = vunpack.c.l.bf16 %v232
      %v265 = vunpack.c.l.bf16 %v233
      %v266 = vld [vmem:[%s1] sm:$0x1]
      %v268 = vlaneseq
      %v269 = vshrl.u32 %v268, 7
      %v270 = vsub.s32 0, %v269
      %v271 = vrot.slane %v266, %v270
      %v273 = vmul.f32 %v234, %v271
      %v274 = vmul.f32 %v235, %v271
      %v275 = vmul.f32 %v236, %v271
      %v276 = vmul.f32 %v237, %v271
      %v277 = vmul.f32 %v238, %v271
      %v278 = vmul.f32 %v239, %v271
      %v279 = vmul.f32 %v240, %v271
      %v280 = vmul.f32 %v241, %v271
      %v281 = vmul.f32 %v242, %v271
      %v282 = vmul.f32 %v243, %v271
      %v283 = vmul.f32 %v244, %v271
      %v284 = vmul.f32 %v245, %v271
      %v285 = vmul.f32 %v246, %v271
      %v286 = vmul.f32 %v247, %v271
      %v287 = vmul.f32 %v248, %v271
      %v288 = vmul.f32 %v249, %v271
      %v289 = vmul.f32 %v250, %v271
      %v290 = vmul.f32 %v251, %v271
      %v291 = vmul.f32 %v252, %v271
      %v292 = vmul.f32 %v253, %v271
      %v293 = vmul.f32 %v254, %v271
      %v294 = vmul.f32 %v255, %v271
      %v295 = vmul.f32 %v256, %v271
      %v296 = vmul.f32 %v257, %v271
      %v297 = vmul.f32 %v258, %v271
      %v298 = vmul.f32 %v259, %v271
      %v299 = vmul.f32 %v260, %v271
      %v300 = vmul.f32 %v261, %v271
      %v301 = vmul.f32 %v262, %v271
      %v302 = vmul.f32 %v263, %v271
      %v303 = vmul.f32 %v264, %v271
      %v304 = vmul.f32 %v265, %v271
      %v305 = vld [vmem:[%s2] sm:$0x1]
      %v307 = vlaneseq
      %v308 = vshrl.u32 %v307, 7
      %v309 = vsub.s32 0, %v308
      %v310 = vrot.slane %v305, %v309
      %v312 = vadd.f32 %v273, %v310
      %v313 = vadd.f32 %v274, %v310
      %v314 = vadd.f32 %v275, %v310
      %v315 = vadd.f32 %v276, %v310
      %v316 = vadd.f32 %v277, %v310
      %v317 = vadd.f32 %v278, %v310
      %v318 = vadd.f32 %v279, %v310
      %v319 = vadd.f32 %v280, %v310
      %v320 = vadd.f32 %v281, %v310
      %v321 = vadd.f32 %v282, %v310
      %v322 = vadd.f32 %v283, %v310
      %v323 = vadd.f32 %v284, %v310
      %v324 = vadd.f32 %v285, %v310
      %v325 = vadd.f32 %v286, %v310
      %v326 = vadd.f32 %v287, %v310
      %v327 = vadd.f32 %v288, %v310
      %v328 = vadd.f32 %v289, %v310
      %v329 = vadd.f32 %v290, %v310
      %v330 = vadd.f32 %v291, %v310
      %v331 = vadd.f32 %v292, %v310
      %v332 = vadd.f32 %v293, %v310
      %v333 = vadd.f32 %v294, %v310
      %v334 = vadd.f32 %v295, %v310
      %v335 = vadd.f32 %v296, %v310
      %v336 = vadd.f32 %v297, %v310
      %v337 = vadd.f32 %v298, %v310
      %v338 = vadd.f32 %v299, %v310
      %v339 = vadd.f32 %v300, %v310
      %v340 = vadd.f32 %v301, %v310
      %v341 = vadd.f32 %v302, %v310
      %v342 = vadd.f32 %v303, %v310
      %v343 = vadd.f32 %v304, %v310
      %v344 = vmax.f32 %v312, 0.0
      %v345 = vmax.f32 %v313, 0.0
      %v346 = vmax.f32 %v314, 0.0
      %v347 = vmax.f32 %v315, 0.0
      %v348 = vmax.f32 %v316, 0.0
      %v349 = vmax.f32 %v317, 0.0
      %v350 = vmax.f32 %v318, 0.0
      %v351 = vmax.f32 %v319, 0.0
      %v352 = vmax.f32 %v320, 0.0
      %v353 = vmax.f32 %v321, 0.0
      %v354 = vmax.f32 %v322, 0.0
      %v355 = vmax.f32 %v323, 0.0
      %v356 = vmax.f32 %v324, 0.0
      %v357 = vmax.f32 %v325, 0.0
      %v358 = vmax.f32 %v326, 0.0
      %v359 = vmax.f32 %v327, 0.0
      %v360 = vmax.f32 %v328, 0.0
      %v361 = vmax.f32 %v329, 0.0
      %v362 = vmax.f32 %v330, 0.0
      %v363 = vmax.f32 %v331, 0.0
      %v364 = vmax.f32 %v332, 0.0
      %v365 = vmax.f32 %v333, 0.0
      %v366 = vmax.f32 %v334, 0.0
      %v367 = vmax.f32 %v335, 0.0
      %v368 = vmax.f32 %v336, 0.0
      %v369 = vmax.f32 %v337, 0.0
      %v370 = vmax.f32 %v338, 0.0
      %v371 = vmax.f32 %v339, 0.0
      %v372 = vmax.f32 %v340, 0.0
      %v373 = vmax.f32 %v341, 0.0
      %v374 = vmax.f32 %v342, 0.0
      %v375 = vmax.f32 %v343, 0.0
      %v376 = vpack.c.bf16 %v345, %v344
      %v377 = vpack.c.bf16 %v347, %v346
      %v378 = vpack.c.bf16 %v349, %v348
      %v379 = vpack.c.bf16 %v351, %v350
      %v380 = vpack.c.bf16 %v353, %v352
      %v381 = vpack.c.bf16 %v355, %v354
      %v382 = vpack.c.bf16 %v357, %v356
      %v383 = vpack.c.bf16 %v359, %v358
      %v384 = vpack.c.bf16 %v361, %v360
      %v385 = vpack.c.bf16 %v363, %v362
      %v386 = vpack.c.bf16 %v365, %v364
      %v387 = vpack.c.bf16 %v367, %v366
      %v388 = vpack.c.bf16 %v369, %v368
      %v389 = vpack.c.bf16 %v371, %v370
      %v390 = vpack.c.bf16 %v373, %v372
      %v391 = vpack.c.bf16 %v375, %v374
      %v392 = vld [vmem:[%s3] sm:$0x3]
      %vm393 = vcmask 31744
      %v395 = vsel %vm393, %v376, 0
      %v398 = vsel %vm393, %v377, 0
      %v401 = vsel %vm393, %v378, 0
      %v404 = vsel %vm393, %v379, 0
      %v407 = vsel %vm393, %v380, 0
      %v410 = vsel %vm393, %v381, 0
      %v413 = vsel %vm393, %v382, 0
      %v416 = vsel %vm393, %v383, 0
      %v419 = vsel %vm393, %v384, 0
      %v422 = vsel %vm393, %v385, 0
      %v425 = vsel %vm393, %v386, 0
      %v428 = vsel %vm393, %v387, 0
      %v431 = vsel %vm393, %v388, 0
      %v434 = vsel %vm393, %v389, 0
      %v437 = vsel %vm393, %v390, 0
      %v440 = vsel %vm393, %v391, 0
      %vm442 = vcmask 1041408
      %v444 = vsel %vm442, %v392, 0
      %446 = vmatprep.subr.bf16.mxu0 0
      %447 = vmatpush1.bf16.msra.mxu0 0
      %448 = vmatprep.subr.bf16.mxu0 0
      %449 = vmatpush1.bf16.msra.mxu0 0
      %450 = vmatprep.subr.bf16.mxu0 0
      %451 = vmatpush1.bf16.msra.mxu0 0
      %452 = vmatprep.subr.bf16.mxu0 0
      %453 = vmatpush1.bf16.msra.mxu0 0
      %454 = vmatprep.subr.bf16.mxu0 0
      %455 = vmatpush1.bf16.msra.mxu0 0
      %456 = vmatprep.subr.bf16.mxu0 0
      %457 = vmatpush1.bf16.msra.mxu0 0
      %458 = vmatprep.subr.bf16.mxu0 0
      %459 = vmatpush1.bf16.msra.mxu0 0
      %460 = vmatprep.subr.bf16.mxu0 0
      %461 = vmatpush1.bf16.msra.mxu0 %v444
      %462 = vmatprep.subr.bf16.mxu0 0
      %463 = vmatpush2.bf16.msra.mxu0 0
      %464 = vmatprep.subr.bf16.mxu0 0
      %465 = vmatpush2.bf16.msra.mxu0 0
      %466 = vmatprep.subr.bf16.mxu0 0
      %467 = vmatpush2.bf16.msra.mxu0 0
      %468 = vmatprep.subr.bf16.mxu0 0
      %469 = vmatpush2.bf16.msra.mxu0 0
      %470 = vmatprep.subr.bf16.mxu0 0
      %471 = vmatpush2.bf16.msra.mxu0 0
      %472 = vmatprep.subr.bf16.mxu0 0
      %473 = vmatpush2.bf16.msra.mxu0 0
      %474 = vmatprep.subr.bf16.mxu0 0
      %475 = vmatpush2.bf16.msra.mxu0 0
      %476 = vmatprep.subr.bf16.mxu0 0
      %477 = vmatpush2.bf16.msra.mxu0 0
      %478 = vmatprep.mubr.bf16.mxu0 0
      %479 = vmatmul.mubr.bf16.gmra.mxu0 %v395
      %v480 = vpop.f32.mrf.mxu0
      %v481 = vadd.f32 0.0, %v480
      %v482 = vpop.f32.mrf.mxu0
      %v483 = vpop.f32.mrf.mxu0
      %v484 = vadd.f32 0.0, %v483
      %v485 = vpop.f32.mrf.mxu0
      %486 = vmatprep.mubr.bf16.mxu0 0
      %487 = vmatmul.mubr.bf16.gmra.mxu0 %v398
      %v488 = vpop.f32.mrf.mxu0
      %v489 = vadd.f32 0.0, %v488
      %v490 = vpop.f32.mrf.mxu0
      %v491 = vpop.f32.mrf.mxu0
      %v492 = vadd.f32 0.0, %v491
      %v493 = vpop.f32.mrf.mxu0
      %494 = vmatprep.mubr.bf16.mxu0 0
      %495 = vmatmul.mubr.bf16.gmra.mxu0 %v401
      %v496 = vpop.f32.mrf.mxu0
      %v497 = vadd.f32 0.0, %v496
      %v498 = vpop.f32.mrf.mxu0
      %v499 = vpop.f32.mrf.mxu0
      %v500 = vadd.f32 0.0, %v499
      %v501 = vpop.f32.mrf.mxu0
      %502 = vmatprep.mubr.bf16.mxu0 0
      %503 = vmatmul.mubr.bf16.gmra.mxu0 %v404
      %v504 = vpop.f32.mrf.mxu0
      %v505 = vadd.f32 0.0, %v504
      %v506 = vpop.f32.mrf.mxu0
      %v507 = vpop.f32.mrf.mxu0
      %v508 = vadd.f32 0.0, %v507
      %v509 = vpop.f32.mrf.mxu0
      %510 = vmatprep.mubr.bf16.mxu0 0
      %511 = vmatmul.mubr.bf16.gmra.mxu0 %v407
      %v512 = vpop.f32.mrf.mxu0
      %v513 = vadd.f32 0.0, %v512
      %v514 = vpop.f32.mrf.mxu0
      %v515 = vpop.f32.mrf.mxu0
      %v516 = vadd.f32 0.0, %v515
      %v517 = vpop.f32.mrf.mxu0
      %518 = vmatprep.mubr.bf16.mxu0 0
      %519 = vmatmul.mubr.bf16.gmra.mxu0 %v410
      %v520 = vpop.f32.mrf.mxu0
      %v521 = vadd.f32 0.0, %v520
      %v522 = vpop.f32.mrf.mxu0
      %v523 = vpop.f32.mrf.mxu0
      %v524 = vadd.f32 0.0, %v523
      %v525 = vpop.f32.mrf.mxu0
      %526 = vmatprep.mubr.bf16.mxu0 0
      %527 = vmatmul.mubr.bf16.gmra.mxu0 %v413
      %v528 = vpop.f32.mrf.mxu0
      %v529 = vadd.f32 0.0, %v528
      %v530 = vpop.f32.mrf.mxu0
      %v531 = vpop.f32.mrf.mxu0
      %v532 = vadd.f32 0.0, %v531
      %v533 = vpop.f32.mrf.mxu0
      %534 = vmatprep.mubr.bf16.mxu0 0
      %535 = vmatmul.mubr.bf16.gmra.mxu0 %v416
      %v536 = vpop.f32.mrf.mxu0
      %v537 = vadd.f32 0.0, %v536
      %v538 = vpop.f32.mrf.mxu0
      %v539 = vpop.f32.mrf.mxu0
      %v540 = vadd.f32 0.0, %v539
      %v541 = vpop.f32.mrf.mxu0
      %542 = vmatprep.mubr.bf16.mxu0 0
      %543 = vmatmul.mubr.bf16.gmra.mxu0 %v419
      %v544 = vpop.f32.mrf.mxu0
      %v545 = vadd.f32 0.0, %v544
      %v546 = vpop.f32.mrf.mxu0
      %v547 = vpop.f32.mrf.mxu0
      %v548 = vadd.f32 0.0, %v547
      %v549 = vpop.f32.mrf.mxu0
      %550 = vmatprep.mubr.bf16.mxu0 0
      %551 = vmatmul.mubr.bf16.gmra.mxu0 %v422
      %v552 = vpop.f32.mrf.mxu0
      %v553 = vadd.f32 0.0, %v552
      %v554 = vpop.f32.mrf.mxu0
      %v555 = vpop.f32.mrf.mxu0
      %v556 = vadd.f32 0.0, %v555
      %v557 = vpop.f32.mrf.mxu0
      %558 = vmatprep.mubr.bf16.mxu0 0
      %559 = vmatmul.mubr.bf16.gmra.mxu0 %v425
      %v560 = vpop.f32.mrf.mxu0
      %v561 = vadd.f32 0.0, %v560
      %v562 = vpop.f32.mrf.mxu0
      %v563 = vpop.f32.mrf.mxu0
      %v564 = vadd.f32 0.0, %v563
      %v565 = vpop.f32.mrf.mxu0
      %566 = vmatprep.mubr.bf16.mxu0 0
      %567 = vmatmul.mubr.bf16.gmra.mxu0 %v428
      %v568 = vpop.f32.mrf.mxu0
      %v569 = vadd.f32 0.0, %v568
      %v570 = vpop.f32.mrf.mxu0
      %v571 = vpop.f32.mrf.mxu0
      %v572 = vadd.f32 0.0, %v571
      %v573 = vpop.f32.mrf.mxu0
      %574 = vmatprep.mubr.bf16.mxu0 0
      %575 = vmatmul.mubr.bf16.gmra.mxu0 %v431
      %v576 = vpop.f32.mrf.mxu0
      %v577 = vadd.f32 0.0, %v576
      %v578 = vpop.f32.mrf.mxu0
      %v579 = vpop.f32.mrf.mxu0
      %v580 = vadd.f32 0.0, %v579
      %v581 = vpop.f32.mrf.mxu0
      %582 = vmatprep.mubr.bf16.mxu0 0
      %583 = vmatmul.mubr.bf16.gmra.mxu0 %v434
      %v584 = vpop.f32.mrf.mxu0
      %v585 = vadd.f32 0.0, %v584
      %v586 = vpop.f32.mrf.mxu0
      %v587 = vpop.f32.mrf.mxu0
      %v588 = vadd.f32 0.0, %v587
      %v589 = vpop.f32.mrf.mxu0
      %590 = vmatprep.mubr.bf16.mxu0 0
      %591 = vmatmul.mubr.bf16.gmra.mxu0 %v437
      %v592 = vpop.f32.mrf.mxu0
      %v593 = vadd.f32 0.0, %v592
      %v594 = vpop.f32.mrf.mxu0
      %v595 = vpop.f32.mrf.mxu0
      %v596 = vadd.f32 0.0, %v595
      %v597 = vpop.f32.mrf.mxu0
      %598 = vmatprep.mubr.bf16.mxu0 0
      %599 = vmatmul.mubr.bf16.gmra.mxu0 %v440
      %v600 = vpop.f32.mrf.mxu0
      %v601 = vadd.f32 0.0, %v600
      %v602 = vpop.f32.mrf.mxu0
      %v603 = vpop.f32.mrf.mxu0
      %v604 = vadd.f32 0.0, %v603
      %v605 = vpop.f32.mrf.mxu0
      %606 = vdwg.mxu0
      %v607 = vpack.c.bf16 %v484, %v481
      %v608 = vpack.c.bf16 %v492, %v489
      %v609 = vpack.c.bf16 %v500, %v497
      %v610 = vpack.c.bf16 %v508, %v505
      %v611 = vpack.c.bf16 %v516, %v513
      %v612 = vpack.c.bf16 %v524, %v521
      %v613 = vpack.c.bf16 %v532, %v529
      %v614 = vpack.c.bf16 %v540, %v537
      %v615 = vpack.c.bf16 %v548, %v545
      %v616 = vpack.c.bf16 %v556, %v553
      %v617 = vpack.c.bf16 %v564, %v561
      %v618 = vpack.c.bf16 %v572, %v569
      %v619 = vpack.c.bf16 %v580, %v577
      %v620 = vpack.c.bf16 %v588, %v585
      %v621 = vpack.c.bf16 %v596, %v593
      %v622 = vpack.c.bf16 %v604, %v601
      %v639 = vunpack.c.l.b16 %v607
      %v640 = vunpack.c.h.b16 %v607
      %v641 = vunpack.c.l.b16 %v608
      %v642 = vunpack.c.h.b16 %v608
      %v643 = vunpack.c.l.b16 %v609
      %v644 = vunpack.c.h.b16 %v609
      %v645 = vunpack.c.l.b16 %v610
      %v646 = vunpack.c.h.b16 %v610
      %v647 = vunpack.c.l.b16 %v611
      %v648 = vunpack.c.h.b16 %v611
      %v649 = vunpack.c.l.b16 %v612
      %v650 = vunpack.c.h.b16 %v612
      %v651 = vunpack.c.l.b16 %v613
      %v652 = vunpack.c.h.b16 %v613
      %v653 = vunpack.c.l.b16 %v614
      %v654 = vunpack.c.h.b16 %v614
      %v655 = vunpack.c.l.b16 %v615
      %v656 = vunpack.c.h.b16 %v615
      %v657 = vunpack.c.l.b16 %v616
      %v658 = vunpack.c.h.b16 %v616
      %v659 = vunpack.c.l.b16 %v617
      %v660 = vunpack.c.h.b16 %v617
      %v661 = vunpack.c.l.b16 %v618
      %v662 = vunpack.c.h.b16 %v618
      %v663 = vunpack.c.l.b16 %v619
      %v664 = vunpack.c.h.b16 %v619
      %v665 = vunpack.c.l.b16 %v620
      %v666 = vunpack.c.h.b16 %v620
      %v667 = vunpack.c.l.b16 %v621
      %v668 = vunpack.c.h.b16 %v621
      %v669 = vunpack.c.l.b16 %v622
      %v670 = vunpack.c.h.b16 %v622
      %v671 = vpack.c.b16 %v639, %v639
      %v672 = vpack.c.b16 %v640, %v640
      %v673 = vpack.c.b16 %v641, %v641
      %v674 = vpack.c.b16 %v642, %v642
      %v675 = vpack.c.b16 %v643, %v643
      %v676 = vpack.c.b16 %v644, %v644
      %v677 = vpack.c.b16 %v645, %v645
      %v678 = vpack.c.b16 %v646, %v646
      %v679 = vpack.c.b16 %v647, %v647
      %v680 = vpack.c.b16 %v648, %v648
      %v681 = vpack.c.b16 %v649, %v649
      %v682 = vpack.c.b16 %v650, %v650
      %v683 = vpack.c.b16 %v651, %v651
      %v684 = vpack.c.b16 %v652, %v652
      %v685 = vpack.c.b16 %v653, %v653
      %v686 = vpack.c.b16 %v654, %v654
      %v687 = vpack.c.b16 %v655, %v655
      %v688 = vpack.c.b16 %v656, %v656
      %v689 = vpack.c.b16 %v657, %v657
      %v690 = vpack.c.b16 %v658, %v658
      %v691 = vpack.c.b16 %v659, %v659
      %v692 = vpack.c.b16 %v660, %v660
      %v693 = vpack.c.b16 %v661, %v661
      %v694 = vpack.c.b16 %v662, %v662
      %v695 = vpack.c.b16 %v663, %v663
      %v696 = vpack.c.b16 %v664, %v664
      %v697 = vpack.c.b16 %v665, %v665
      %v698 = vpack.c.b16 %v666, %v666
      %v699 = vpack.c.b16 %v667, %v667
      %v700 = vpack.c.b16 %v668, %v668
      %v701 = vpack.c.b16 %v669, %v669
      %v702 = vpack.c.b16 %v670, %v670
      %vm735 = vcmask 257024
      %736 = vst.msk [vmem:[%s199] sm:$0xf] %vm735, %v671
      %737 = vst.msk [vmem:[%s199 + $0x4] sm:$0xf] %vm735, %v672
      %738 = vst.msk [vmem:[%s199 + $0x8] sm:$0xf] %vm735, %v673
      %739 = vst.msk [vmem:[%s199 + $0xc] sm:$0xf] %vm735, %v674
      %740 = vst.msk [vmem:[%s199 + $0x10] sm:$0xf] %vm735, %v675
      %741 = vst.msk [vmem:[%s199 + $0x14] sm:$0xf] %vm735, %v676
      %742 = vst.msk [vmem:[%s199 + $0x18] sm:$0xf] %vm735, %v677
      %743 = vst.msk [vmem:[%s199 + $0x1c] sm:$0xf] %vm735, %v678
      %744 = vst.msk [vmem:[%s199 + $0x20] sm:$0xf] %vm735, %v679
      %745 = vst.msk [vmem:[%s199 + $0x24] sm:$0xf] %vm735, %v680
      %746 = vst.msk [vmem:[%s199 + $0x28] sm:$0xf] %vm735, %v681
      %747 = vst.msk [vmem:[%s199 + $0x2c] sm:$0xf] %vm735, %v682
      %748 = vst.msk [vmem:[%s199 + $0x30] sm:$0xf] %vm735, %v683
      %749 = vst.msk [vmem:[%s199 + $0x34] sm:$0xf] %vm735, %v684
      %750 = vst.msk [vmem:[%s199 + $0x38] sm:$0xf] %vm735, %v685
      %751 = vst.msk [vmem:[%s199 + $0x3c] sm:$0xf] %vm735, %v686
      %752 = vst.msk [vmem:[%s199 + $0x40] sm:$0xf] %vm735, %v687
      %753 = vst.msk [vmem:[%s199 + $0x44] sm:$0xf] %vm735, %v688
      %754 = vst.msk [vmem:[%s199 + $0x48] sm:$0xf] %vm735, %v689
      %755 = vst.msk [vmem:[%s199 + $0x4c] sm:$0xf] %vm735, %v690
      %756 = vst.msk [vmem:[%s199 + $0x50] sm:$0xf] %vm735, %v691
      %757 = vst.msk [vmem:[%s199 + $0x54] sm:$0xf] %vm735, %v692
      %758 = vst.msk [vmem:[%s199 + $0x58] sm:$0xf] %vm735, %v693
      %759 = vst.msk [vmem:[%s199 + $0x5c] sm:$0xf] %vm735, %v694
      %760 = vst.msk [vmem:[%s199 + $0x60] sm:$0xf] %vm735, %v695
      %761 = vst.msk [vmem:[%s199 + $0x64] sm:$0xf] %vm735, %v696
      %762 = vst.msk [vmem:[%s199 + $0x68] sm:$0xf] %vm735, %v697
      %763 = vst.msk [vmem:[%s199 + $0x6c] sm:$0xf] %vm735, %v698
      %764 = vst.msk [vmem:[%s199 + $0x70] sm:$0xf] %vm735, %v699
      %765 = vst.msk [vmem:[%s199 + $0x74] sm:$0xf] %vm735, %v700
      %766 = vst.msk [vmem:[%s199 + $0x78] sm:$0xf] %vm735, %v701
      %767 = vst.msk [vmem:[%s199 + $0x7c] sm:$0xf] %vm735, %v702
      %s768 = smul.u32 32, %s15
      %p769 = scmp.lt.s32.totalorder %s768, 63
      %s770 = scalar_select %p769, %s768, 63
      %s771 = smul.addr %s770, 4
      %s772 = scalar_lea.vmem %s4, %s771
      // Predicated region
      $region37: #{tpu_custom_call.1} parent=35 // pred_check
        %p773 = pneg %p122
      $region38: #{tpu_custom_call.1} parent=35 // pred_check_branch
        %775 = sbr.rel (%p773) target = $region40
      $region39: #{tpu_custom_call.1} parent=35 // pred_region
        %s776 = smul.u32 32, %s15
      $region40: #{tpu_custom_call.1} parent=35 // pred_fallthru
        _
    $region36: #{tpu_custom_call.1} parent=5 // pred_fallthru
      _
    %p777 = scmp.le.s32.totalorder 2, %s10
    // Predicated region
    $region41: #{tpu_custom_call.1} parent=5 // pred_check
      %p778 = pneg %p777
    $region42: #{tpu_custom_call.1} parent=5 // pred_check_branch
      %780 = sbr.rel (%p778) target = $region44
    $region43: #{tpu_custom_call.1} parent=5 // pred_region
      %s781 = ssub.s32 %s10, 2
      // Predicated region
      $region45: #{tpu_custom_call.1} parent=43 // pred_check
        %p782 = pneg %p128
      $region46: #{tpu_custom_call.1} parent=43 // pred_check_branch
        %784 = sbr.rel (%p782) target = $region48
      $region47: #{tpu_custom_call.1} parent=43 // pred_region
        %s785 = smul.u32 32, %s16
        %p786 = scmp.lt.s32.totalorder %s785, 63
        %s787 = scalar_select %p786, %s785, 63
        %s788 = smul.addr %s787, 4
        %s789 = scalar_lea.vmem %s4, %s788
      $region48: #{tpu_custom_call.1} parent=43 // pred_fallthru
        _
    $region44: #{tpu_custom_call.1} parent=5 // pred_fallthru
      _
  $region6: #{tpu_custom_call.1} parent=0 // loop_footer
    %s14 = sadd.s32 1, %s10
  $region7: #{tpu_custom_call.1} parent=0 // loop_footer_branch
    %9 = sbr.rel target = $region3
  $region8: #{tpu_custom_call.1} parent=0 // loop_exit
    _

</llo_original>
